<compile_context>
chip_gen: v7x
topology: tpu7x:2x2x1
jax: 0.10.0
libtpu: 0.0.40
codegen_flags: <defaults>
</compile_context>

<pallas_src>
import functools

import jax
import jax.numpy as jnp
from jax import lax
from jax.experimental import pallas as pl
from jax.experimental.pallas import tpu as pltpu


def _layernorm_kernel(x_ref, w_ref, b_ref, o_ref, *, eps, inv_h):
    # x_ref: (block_rows, H), w_ref/b_ref: (1, H)
    x = x_ref[...].astype(jnp.float32)
    # One-pass mean / variance: single sweep over the tile.
    s = jnp.sum(x, axis=-1, keepdims=True)
    s2 = jnp.sum(x * x, axis=-1, keepdims=True)
    mean = s * inv_h
    var = jnp.maximum(s2 * inv_h - mean * mean, 0.0)  # guard cancellation
    inv = lax.rsqrt(var + eps)
    w = w_ref[...].astype(jnp.float32)
    b = b_ref[...].astype(jnp.float32)
    o_ref[...] = ((x - mean) * inv * w + b).astype(o_ref.dtype)


def _sublane_pack(dtype):
    # f32 -> 8, bf16 -> 16, int8/fp8 -> 32 sublane packing.
    itemsize = jnp.dtype(dtype).itemsize
    return max(8, 32 // max(itemsize, 1))


def _pick_block_rows(rows, hidden, dtype, vmem_budget_bytes):
    itemsize = jnp.dtype(dtype).itemsize
    # Per-row VMEM cost: input + output blocks double-buffered (x2 each) plus
    # ~3 f32-sized temporaries live inside the kernel body.
    cost_per_row = 4 * hidden * itemsize + 3 * hidden * 4
    pack = _sublane_pack(dtype)
    br = max(pack, vmem_budget_bytes // cost_per_row)
    br = min(br, 1024)                      # curve flattens past ~512-1024 rows
    br = max(pack, (br // pack) * pack)     # sublane-aligned
    # Don't tile past the (pack-rounded) row count for tiny inputs.
    rows_rounded = ((rows + pack - 1) // pack) * pack
    return min(br, rows_rounded)


def abq_layer_norm(x, weight, bias=None, *, eps=1e-5, block_rows=None,
                   vmem_budget_bytes=28 * 1024 * 1024):
    """LayerNorm over the last dim of x (matches F.layer_norm with
    normalized_shape=(hidden,), elementwise affine weight/bias)."""
    # TODO(synk): quant-state flags / temporary-parameter switching from the
    # PyTorch module are host-side bookkeeping; only the affine LayerNorm math
    # is implemented here.
    orig_shape = x.shape
    hidden = orig_shape[-1]
    rows = 1
    for d in orig_shape[:-1]:
        rows *= d
    x2d = x.reshape(rows, hidden)

    if bias is None:
        bias = jnp.zeros((hidden,), dtype=weight.dtype)

    pack = _sublane_pack(x.dtype)
    if block_rows is None:
        block_rows = _pick_block_rows(rows, hidden, x.dtype, vmem_budget_bytes)
    block_rows = max(pack, (int(block_rows) // pack) * pack)

    # Ragged tails are handled by Pallas's partial last block: reads pad the
    # VMEM buffer, out-of-bounds writes are dropped. Rows are independent, so
    # no host-side padding / slicing (and no extra HBM copy) is needed.
    grid_steps = pl.cdiv(rows, block_rows)

    w2d = weight.reshape(1, hidden)
    b2d = bias.reshape(1, hidden)

    kernel = functools.partial(
        _layernorm_kernel, eps=float(eps), inv_h=float(1.0 / hidden))

    # Big tiles need more than the default scoped VMEM (16 MiB on v5e,
    # 32 MiB on v6e/v7x); 48 MiB is safely under v7x's 64 MiB physical VMEM.
    vmem_limit = 48 * 1024 * 1024

    out2d = pl.pallas_call(
        kernel,
        out_shape=jax.ShapeDtypeStruct((rows, hidden), x.dtype),
        grid_spec=pltpu.PrefetchScalarGridSpec(
            num_scalar_prefetch=0,
            grid=(grid_steps,),
            in_specs=[
                pl.BlockSpec((block_rows, hidden), lambda i: (i, 0)),
                pl.BlockSpec((1, hidden), lambda i: (0, 0)),
                pl.BlockSpec((1, hidden), lambda i: (0, 0)),
            ],
            out_specs=pl.BlockSpec((block_rows, hidden), lambda i: (i, 0)),
        ),
        compiler_params=pltpu.CompilerParams(
            dimension_semantics=("parallel",),
            vmem_limit_bytes=vmem_limit,
        ),
    )(x2d, w2d, b2d)

    return out2d.reshape(orig_shape)


def _reference_layer_norm(x, weight, bias, eps):
    xf = x.astype(jnp.float32)
    mean = jnp.mean(xf, axis=-1, keepdims=True)
    var = jnp.mean((xf - mean) ** 2, axis=-1, keepdims=True)
    y = (xf - mean) / jnp.sqrt(var + eps)
    return (y * weight + bias).astype(x.dtype)


if __name__ == "__main__":
    # Small shapes consistent with a transformer LayerNorm:
    # batch=2, seq=8, hidden=32; normalized_shape=(32,)
    batch, seq, hidden = 2, 8, 32
    eps = 1e-5

    key = jax.random.PRNGKey(0)
    kx, kw, kb = jax.random.split(key, 3)

    x = jax.random.normal(kx, (batch, seq, hidden), dtype=jnp.float32)
    # Random affine parameters so the weight/bias path is actually exercised.
    weight = 1.0 + 0.1 * jax.random.normal(kw, (hidden,), dtype=jnp.float32)
    bias = 0.1 * jax.random.normal(kb, (hidden,), dtype=jnp.float32)

    out = abq_layer_norm(x, weight, bias, eps=eps)
    out = jax.block_until_ready(out)

    ref = _reference_layer_norm(x, weight, bias, eps)
    assert out.shape == x.shape and out.dtype == x.dtype
    assert jnp.allclose(out, ref, atol=1e-5, rtol=1e-5), "mismatch vs reference"

    # Exercise a ragged (non-tile-multiple) row count to cover the partial
    # last-block path.
    x2 = jax.random.normal(kx, (3, 5, hidden), dtype=jnp.float32)
    out2 = jax.block_until_ready(abq_layer_norm(x2, weight, bias, eps=eps))
    ref2 = _reference_layer_norm(x2, weight, bias, eps)
    assert jnp.allclose(out2, ref2, atol=1e-5, rtol=1e-5), "ragged mismatch"

    print("KERNEL_OK")
</pallas_src>

<mosaic_0001>
module attributes {stable_mosaic.version = 11 : i64} {
  func.func @_layernorm_kernel(%arg0: i32, %arg1: memref<16x32xf32, #tpu.memory_space<vmem>>, %arg2: memref<1x32xf32, #tpu.memory_space<vmem>>, %arg3: memref<1x32xf32, #tpu.memory_space<vmem>>, %arg4: memref<16x32xf32, #tpu.memory_space<vmem>>) attributes {dimension_semantics = [#tpu.dimension_semantics<parallel>], iteration_bounds = array<i64: 1>, scalar_prefetch = 0 : i64, scratch_operands = 0 : i64, tpu.core_type = #tpu.core_type<tc>, window_params = [{transform_indices = @transform_0, window_bounds = array<i64: 16, 32>}, {pipeline_mode = #tpu.pipeline_mode<synchronous>, transform_indices = @transform_1, window_bounds = array<i64: 1, 32>}, {pipeline_mode = #tpu.pipeline_mode<synchronous>, transform_indices = @transform_2, window_bounds = array<i64: 1, 32>}, {transform_indices = @transform_3, window_bounds = array<i64: 16, 32>}]} {
    %c0 = arith.constant 0 : index
    %c0_0 = arith.constant 0 : index
    %0 = vector.load %arg1[%c0, %c0_0] : memref<16x32xf32, #tpu.memory_space<vmem>>, vector<16x32xf32>
    %cst = arith.constant dense<0.000000e+00> : vector<16xf32>
    %1 = vector.multi_reduction <add>, %0, %cst [1] : vector<16x32xf32> to vector<16xf32>
    %2 = vector.shape_cast %1 : vector<16xf32> to vector<16x1xf32>
    %3 = arith.mulf %0, %0 : vector<16x32xf32>
    %cst_1 = arith.constant dense<0.000000e+00> : vector<16xf32>
    %4 = vector.multi_reduction <add>, %3, %cst_1 [1] : vector<16x32xf32> to vector<16xf32>
    %5 = vector.shape_cast %4 : vector<16xf32> to vector<16x1xf32>
    %cst_2 = arith.constant 3.125000e-02 : f32
    %6 = vector.broadcast %cst_2 : f32 to vector<16x1xf32>
    %7 = arith.mulf %2, %6 : vector<16x1xf32>
    %cst_3 = arith.constant 3.125000e-02 : f32
    %8 = vector.broadcast %cst_3 : f32 to vector<16x1xf32>
    %9 = arith.mulf %5, %8 : vector<16x1xf32>
    %10 = arith.mulf %7, %7 : vector<16x1xf32>
    %11 = arith.subf %9, %10 : vector<16x1xf32>
    %cst_4 = arith.constant 0.000000e+00 : f32
    %12 = vector.broadcast %cst_4 : f32 to vector<16x1xf32>
    %13 = arith.maximumf %11, %12 : vector<16x1xf32>
    %cst_5 = arith.constant 9.99999974E-6 : f32
    %14 = vector.broadcast %cst_5 : f32 to vector<16x1xf32>
    %15 = arith.addf %13, %14 : vector<16x1xf32>
    %16 = math.rsqrt %15 : vector<16x1xf32>
    %c0_6 = arith.constant 0 : index
    %c0_7 = arith.constant 0 : index
    %17 = vector.load %arg2[%c0_6, %c0_7] : memref<1x32xf32, #tpu.memory_space<vmem>>, vector<1x32xf32>
    %c0_8 = arith.constant 0 : index
    %c0_9 = arith.constant 0 : index
    %18 = vector.load %arg3[%c0_8, %c0_9] : memref<1x32xf32, #tpu.memory_space<vmem>>, vector<1x32xf32>
    %19 = vector.broadcast %7 : vector<16x1xf32> to vector<16x32xf32>
    %20 = arith.subf %0, %19 : vector<16x32xf32>
    %21 = vector.broadcast %16 : vector<16x1xf32> to vector<16x32xf32>
    %22 = arith.mulf %20, %21 : vector<16x32xf32>
    %23 = vector.broadcast %17 : vector<1x32xf32> to vector<16x32xf32>
    %24 = arith.mulf %22, %23 : vector<16x32xf32>
    %25 = vector.broadcast %18 : vector<1x32xf32> to vector<16x32xf32>
    %26 = arith.addf %24, %25 : vector<16x32xf32>
    %c0_10 = arith.constant 0 : index
    %c0_11 = arith.constant 0 : index
    %27 = vector.load %arg4[%c0_10, %c0_11] : memref<16x32xf32, #tpu.memory_space<vmem>>, vector<16x32xf32>
    tpu.vector_store %arg4[%c0_10, %c0_11], %26 {strides = array<i32>} : memref<16x32xf32, #tpu.memory_space<vmem>>, vector<16x32xf32>,
    return
  }
  func.func @transform_0(%arg0: i32) -> (i32, i32) {
    %c0_i32 = arith.constant 0 : i32
    %c0_i32_0 = arith.constant 0 : i32
    return %arg0, %c0_i32 : i32, i32
  }
  func.func @transform_1(%arg0: i32) -> (i32, i32) {
    %c0_i32 = arith.constant 0 : i32
    %c0_i32_0 = arith.constant 0 : i32
    %c0_i32_1 = arith.constant 0 : i32
    return %c0_i32, %c0_i32_0 : i32, i32
  }
  func.func @transform_2(%arg0: i32) -> (i32, i32) {
    %c0_i32 = arith.constant 0 : i32
    %c0_i32_0 = arith.constant 0 : i32
    %c0_i32_1 = arith.constant 0 : i32
    return %c0_i32, %c0_i32_0 : i32, i32
  }
  func.func @transform_3(%arg0: i32) -> (i32, i32) {
    %c0_i32 = arith.constant 0 : i32
    %c0_i32_0 = arith.constant 0 : i32
    return %arg0, %c0_i32 : i32, i32
  }
}

</mosaic_0001>

<llo_original>
// kernel: tpu_custom_call.1
$region0: #{tpu_custom_call.1}
  #allocation0 [shape = 'u32[]', space=smem, size = 0x4, offset = 0x4, fixed_abs, tag = 'smem constant byte address 0x4 - core index']
  #allocation1 [shape = 'u32[144,128]{1,0:T(1,128)}', space=vmem, size = 0x12000, scoped, tag = 'internal scratch']
  %s0 = inlined_call_operand.hbm [shape: f32[16,32], index: 0, kind: input, shape index: {}]
  %s1 = inlined_call_operand.vmem [shape: f32[1,32], index: 1, kind: input, shape index: {}]
  %s2 = inlined_call_operand.vmem [shape: f32[1,32], index: 2, kind: input, shape index: {}]
  %s3 = inlined_call_operand.hbm [shape: f32[16,32], index: 3, kind: output, shape index: {}]
  %s4 = sld [smem:[#allocation0]]
  $region26: #{tpu_custom_call.1} parent=0
    _
  %s6 = ssub.s32 1, %s4
  %s7 = scalar_select 0, %s6, %s4
  $region1: #{tpu_custom_call.1} parent=0
    #allocation2 [shape = 'u8[8192]{0}', space=vmem, size = 0x2000, scoped, tag = 'input window, operand 0, single buffered']
    #allocation3 [shape = 's32[1]{0}', space=sflag, size = 0x4, scoped, tag = 'scoped memory for tpu_custom_call.1']
    #allocation4 [shape = 's32[1]{0}', space=sflag, size = 0x4, scoped, tag = 'scoped memory for tpu_custom_call.1']
    #allocation5 [shape = 'u8[8192]{0}', space=vmem, size = 0x2000, scoped, tag = 'output window, operand 0, single buffered']
    %8 = vsyncpa [#allocation3], 0
    %9 = vsyncpa [#allocation4], 0
    // Predicated region
    $region2: #{tpu_custom_call.1} parent=1 // pred_check
      _
    $region3: #{tpu_custom_call.1} parent=1 // pred_check_branch
      %11 = sbr.rel (0) target = $region5
    $region4: #{tpu_custom_call.1} parent=1 // pred_region
      %s13 = ssub.s32 256, 256
      %14 = vsyncadd [#allocation3], %s13
      %s15 = sshll.u32 [#allocation2], 4
      %s16 = int_to_ptr.vmem [resolvable:$true] %s15
      %21 = dma.hbm_to_vmem [thread:$0]  %s0, 256, %s16, [#allocation3], 128, 128, 8
    $region5: #{tpu_custom_call.1} parent=1 // pred_fallthru
      _
    // Predicated region
    $region6: #{tpu_custom_call.1} parent=1 // pred_check
      _
    $region7: #{tpu_custom_call.1} parent=1 // pred_check_branch
      %23 = sbr.rel (0) target = $region9
    $region8: #{tpu_custom_call.1} parent=1 // pred_region
      _
    $region9: #{tpu_custom_call.1} parent=1 // pred_fallthru
      _
    // Predicated region
    $region10: #{tpu_custom_call.1} parent=1 // pred_check
      _
    $region11: #{tpu_custom_call.1} parent=1 // pred_check_branch
      %25 = sbr.rel (0) target = $region13
    $region12: #{tpu_custom_call.1} parent=1 // pred_region
      _
    $region13: #{tpu_custom_call.1} parent=1 // pred_fallthru
      _
    // Predicated region
    $region14: #{tpu_custom_call.1} parent=1 // pred_check
      _
    $region15: #{tpu_custom_call.1} parent=1 // pred_check_branch
      %27 = sbr.rel (0) target = $region17
    $region16: #{tpu_custom_call.1} parent=1 // pred_region
      %28 = dma.done [#allocation3], 256
    $region17: #{tpu_custom_call.1} parent=1 // pred_fallthru
      _
    %v29 = vld [vmem:[#allocation2] sm:$0xff]
    %v30 = vld [vmem:[#allocation2 + $0x8] sm:$0xff]
    %vm31 = vcmask 261120
    %v32 = vsel %vm31, %v29, 0.0
    %33 = vadd.xlane.f32.xlu0 %v32
    %v34 = vpop.xlane.xlu0 %33
    %v35 = vsel %vm31, %v30, 0.0
    %36 = vadd.xlane.f32.xlu0 %v35
    %v37 = vpop.xlane.xlu0 %36
    %v38 = vmul.f32 %v29, %v29
    %v39 = vmul.f32 %v30, %v30
    %v40 = vsel %vm31, %v38, 0.0
    %41 = vadd.xlane.f32.xlu0 %v40
    %v42 = vpop.xlane.xlu0 %41
    %v43 = vsel %vm31, %v39, 0.0
    %44 = vadd.xlane.f32.xlu0 %v43
    %v45 = vpop.xlane.xlu0 %44
    %v46 = vmul.f32 %v34, 0.03125
    %v47 = vmul.f32 %v37, 0.03125
    %v48 = vmul.f32 %v42, 0.03125
    %v49 = vmul.f32 %v45, 0.03125
    %v50 = vmul.f32 %v46, %v46
    %v51 = vmul.f32 %v47, %v47
    %v52 = vsub.f32 %v48, %v50
    %v53 = vsub.f32 %v49, %v51
    %v54 = vmax.f32 %v52, 0.0
    %v55 = vmax.f32 %v53, 0.0
    %v56 = vadd.f32 %v54, 1e-05
    %v57 = vadd.f32 %v55, 1e-05
    %v58 = vrsqrt.pop %v56
    %v59 = vrsqrt.pop %v57
    %v60 = vld [vmem:[%s1] sm:$0x1]
    %v61 = vld [vmem:[%s2] sm:$0x1]
    %v62 = vsub.f32 %v29, %v46
    %v63 = vsub.f32 %v30, %v47
    %v64 = vmul.f32 %v62, %v58
    %v65 = vmul.f32 %v63, %v59
    %v67 = vlaneseq
    %v68 = vshrl.u32 %v67, 7
    %v69 = vsub.s32 0, %v68
    %v70 = vrot.slane %v60, %v69
    %v72 = vmul.f32 %v64, %v70
    %v73 = vmul.f32 %v65, %v70
    %v75 = vlaneseq
    %v76 = vshrl.u32 %v75, 7
    %v77 = vsub.s32 0, %v76
    %v78 = vrot.slane %v61, %v77
    %v80 = vadd.f32 %v72, %v78
    %v81 = vadd.f32 %v73, %v78
    %82 = vst.msk [vmem:[#allocation5] sm:$0xff] %vm31, %v80
    %83 = vst.msk [vmem:[#allocation5 + $0x8] sm:$0xff] %vm31, %v81
    // Predicated region
    $region18: #{tpu_custom_call.1} parent=1 // pred_check
      _
    $region19: #{tpu_custom_call.1} parent=1 // pred_check_branch
      %85 = sbr.rel (0) target = $region21
    $region20: #{tpu_custom_call.1} parent=1 // pred_region
      %s87 = ssub.s32 256, 256
      %88 = vsyncadd [#allocation4], %s87
      %s89 = sshll.u32 [#allocation5], 4
      %s90 = int_to_ptr.vmem [resolvable:$true] %s89
      %95 = dma.vmem_to_hbm [thread:$0]  %s90, 256, %s3, [#allocation4], 128, 128, 8
    $region21: #{tpu_custom_call.1} parent=1 // pred_fallthru
      _
    // Predicated region
    $region22: #{tpu_custom_call.1} parent=1 // pred_check
      _
    $region23: #{tpu_custom_call.1} parent=1 // pred_check_branch
      %97 = sbr.rel (0) target = $region25
    $region24: #{tpu_custom_call.1} parent=1 // pred_region
      %98 = dma.done [#allocation4], 256
    $region25: #{tpu_custom_call.1} parent=1 // pred_fallthru
      _
    %99 = vsyncpa [#allocation3], 1
    %100 = vsyncpa [#allocation4], 1

</llo_original>
